<compile_context>
chip_gen: v7x
topology: tpu7x:2x2x1
jax: 0.10.0
libtpu: 0.0.40
codegen_flags: <defaults>
</compile_context>

<pallas_src>
import functools

import jax
import jax.numpy as jnp
import numpy as np
from jax import lax
from jax.experimental import pallas as pl
from jax.experimental.pallas import tpu as pltpu


def _conv_ps_kernel(x_ref, w_ref, b_ref, m_ref, o_ref, patches_ref,
                    *, K, H, W, pad, NB):
    """Direct conv as one im2col matmul, spatial (and batch tile) on lanes.

    x_ref:       (NB, Cin, H*W)        NB batch elements, spatial flattened
    w_ref:       (Cout*r*r, K*K*Cin)   weight, columns ordered (kh, kw, ci)
    b_ref:       (Cout*r*r, 1)         bias
    m_ref:       (K*K, 1, H*W)         {0,1} boundary masks per tap
    o_ref:       (NB, Cout*r*r, H*W)   conv output (pre pixel-shuffle)
    patches_ref: (K*K*Cin, NB*H*W)     VMEM scratch for the im2col matrix
    """
    HW = H * W
    Cin = x_ref.shape[1]
    x = x_ref[...]                                   # (NB, Cin, HW), f32
    masks = m_ref[...]                               # (K*K, 1, HW), loaded once

    # im2col: each tap is a lane rotation (XLU) + boundary mask (VPU), staged
    # into the patches scratch so a single MXU matmul contracts over all
    # K*K*Cin at once.  Per-image rolls -> no cross-batch contamination; any
    # wrap across an image edge lands on a masked (out-of-bounds) position.
    for n in range(NB):
        xn = x[n]                                    # (Cin, HW)
        col0 = n * HW                                # lane offset, multiple of 128
        for kh in range(K):
            for kw in range(K):
                dh = kh - pad
                dw = kw - pad
                shift = dh * W + dw                  # flat-index offset of tap
                t = kh * K + kw
                if shift == 0:
                    slab = xn                        # centre tap: no shift/mask
                else:
                    rolled = pltpu.roll(xn, shift=(-shift) % HW, axis=1)
                    slab = rolled * masks[t]         # (Cin,HW) * (1,HW)
                patches_ref[t * Cin:(t + 1) * Cin, col0:col0 + HW] = slab

    # Single MXU matmul with f32 accumulation; bias added in one VPU pass.
    acc = jnp.dot(w_ref[...], patches_ref[...],
                  preferred_element_type=jnp.float32)      # (Cout*r*r, NB*HW)
    y = (acc + b_ref[...]).astype(o_ref.dtype)

    # Split the lane-folded batch back out; static, 128-aligned lane slices.
    for n in range(NB):
        o_ref[n] = y[:, n * HW:(n + 1) * HW]


def _tap_masks(K, H, W, pad, dtype):
    """(K*K, 1, H*W) {0,1} masks zeroing taps that fall outside the image."""
    hh, ww = np.meshgrid(np.arange(H), np.arange(W), indexing="ij")
    masks = []
    for kh in range(K):
        for kw in range(K):
            dh, dw = kh - pad, kw - pad
            valid = ((hh + dh >= 0) & (hh + dh < H) &
                     (ww + dw >= 0) & (ww + dw < W))
            masks.append(valid.reshape(1, H * W))
    return jnp.asarray(np.stack(masks, axis=0), dtype=dtype)


def pixel_shuffle_pack(x_nchw, weight, bias, scale_factor, upsample_kernel,
                       batch_tile=None):
    """Forward pass of PixelShufflePack.

    x_nchw:  (N, Cin, H, W)
    weight:  (K, K, Cin, Cout*r*r)   HWIO conv weight
    bias:    (Cout*r*r,)
    returns: (N, Cout, H*r, W*r)     NCHW, matching the PyTorch module
    """
    r = scale_factor
    K = upsample_kernel
    if K % 2 != 1:
        # padding=(K-1)//2 only gives 'same' output for odd K.
        raise ValueError("PixelShufflePack Pallas kernel requires an odd "
                         "upsample_kernel.")
    N, Cin, H, W = x_nchw.shape
    Cout_total = weight.shape[-1]
    Cout = Cout_total // (r * r)
    HW = H * W
    KKC = K * K * Cin
    pad = (K - 1) // 2

    # Batch tile folded onto the lane axis: widest divisor of N that keeps the
    # im2col scratch small and the lane axis a sane width.
    if batch_tile is None:
        batch_tile = 1
        for nb in range(1, N + 1):
            if (N % nb == 0 and nb * HW <= 4096
                    and nb * HW * KKC * 4 <= 4 * 1024 * 1024):
                batch_tile = nb
    NB = batch_tile
    if N % NB != 0:
        raise ValueError("batch_tile must divide the batch size.")

    # Free contiguous collapse of spatial dims; no transpose, no pad.
    x_flat = x_nchw.reshape(N, Cin, HW)
    # Weight as a single 2-D matmul operand: rows = Cout*r*r, cols ordered
    # (kh, kw, ci) to match the in-kernel patch layout.
    w2d = jnp.transpose(weight.reshape(KKC, Cout_total), (1, 0))
    b2d = bias.reshape(Cout_total, 1)
    masks = _tap_masks(K, H, W, pad, x_nchw.dtype)

    kernel = functools.partial(_conv_ps_kernel, K=K, H=H, W=W, pad=pad, NB=NB)

    y = pl.pallas_call(
        kernel,
        out_shape=jax.ShapeDtypeStruct((N, Cout_total, HW), x_nchw.dtype),
        grid_spec=pltpu.PrefetchScalarGridSpec(
            num_scalar_prefetch=0,
            grid=(N // NB,),
            in_specs=[
                pl.BlockSpec((NB, Cin, HW), lambda b: (b, 0, 0)),
                pl.BlockSpec((Cout_total, KKC), lambda b: (0, 0)),
                pl.BlockSpec((Cout_total, 1), lambda b: (0, 0)),
                pl.BlockSpec((K * K, 1, HW), lambda b: (0, 0, 0)),
            ],
            out_specs=pl.BlockSpec((NB, Cout_total, HW), lambda b: (b, 0, 0)),
            scratch_shapes=[pltpu.VMEM((KKC, NB * HW), jnp.float32)],
        ),
        compiler_params=pltpu.CompilerParams(
            dimension_semantics=("parallel",)),
    )(x_flat, w2d, b2d, masks)

    # pixel_shuffle: out[n,c,h*r+i,w*r+j] = y[n, c*r*r + i*r + j, h*W+w].
    # Reshapes are free contiguous splits/collapses; the transpose is the
    # single remaining XLA data-movement op.
    y = y.reshape(N, Cout, r, r, H, W)
    y = jnp.transpose(y, (0, 1, 4, 2, 5, 3))          # (N, Cout, H, r, W, r)
    return y.reshape(N, Cout, H * r, W * r)


def xavier_uniform_conv_weight(key, k, cin, cout_total, gain=1.0):
    """Xavier/Glorot uniform, matching torch fan computation for Conv2d."""
    fan_in = cin * k * k
    fan_out = cout_total * k * k
    a = gain * jnp.sqrt(6.0 / (fan_in + fan_out))
    return jax.random.uniform(key, (k, k, cin, cout_total),
                              minval=-a, maxval=a, dtype=jnp.float32)


if __name__ == "__main__":
    # Module config: in_channels=4, out_channels=4, scale_factor=2, kernel=3
    in_channels, out_channels, scale_factor, upsample_kernel = 4, 4, 2, 3
    cout_total = out_channels * scale_factor * scale_factor

    key = jax.random.PRNGKey(0)
    kx, kw = jax.random.split(key)

    x = jax.random.normal(kx, (2, in_channels, 16, 16), dtype=jnp.float32)
    weight = xavier_uniform_conv_weight(kw, upsample_kernel, in_channels,
                                        cout_total)
    bias = jnp.zeros((cout_total,), dtype=jnp.float32)  # xavier_init -> bias 0

    fwd = jax.jit(functools.partial(pixel_shuffle_pack,
                                    scale_factor=scale_factor,
                                    upsample_kernel=upsample_kernel))
    out = fwd(x, weight, bias)
    out = jax.block_until_ready(out)

    # Reference: lax.conv (NCHW) + pixel shuffle in plain JAX.
    w_oihw = jnp.transpose(weight, (3, 2, 0, 1))         # (Cout*r*r, Cin, K, K)
    pad = (upsample_kernel - 1) // 2
    ref_conv = lax.conv_general_dilated(
        x, w_oihw, window_strides=(1, 1),
        padding=((pad, pad), (pad, pad)),
        dimension_numbers=("NCHW", "OIHW", "NCHW")) + bias[None, :, None, None]
    N, _, H, W = x.shape
    r = scale_factor
    ref = ref_conv.reshape(N, out_channels, r, r, H, W)
    ref = jnp.transpose(ref, (0, 1, 4, 2, 5, 3)).reshape(
        N, out_channels, H * r, W * r)

    assert out.shape == (2, out_channels, 16 * r, 16 * r), out.shape
    assert jnp.allclose(out, ref, atol=1e-3, rtol=1e-3), "mismatch vs reference"

    print("KERNEL_OK")
</pallas_src>

<mosaic_0001>
module attributes {stable_mosaic.version = 11 : i64} {
  func.func @_conv_ps_kernel(%arg0: i32, %arg1: memref<2x4x256xf32, #tpu.memory_space<vmem>>, %arg2: memref<16x36xf32, #tpu.memory_space<vmem>>, %arg3: memref<16x1xf32, #tpu.memory_space<vmem>>, %arg4: memref<9x1x256xf32, #tpu.memory_space<vmem>>, %arg5: memref<2x16x256xf32, #tpu.memory_space<vmem>>, %arg6: memref<36x512xf32, #tpu.memory_space<vmem>>) attributes {dimension_semantics = [#tpu.dimension_semantics<parallel>], iteration_bounds = array<i64: 1>, scalar_prefetch = 0 : i64, scratch_operands = 1 : i64, tpu.core_type = #tpu.core_type<tc>, window_params = [{transform_indices = @transform_0, window_bounds = array<i64: 2, 4, 256>}, {pipeline_mode = #tpu.pipeline_mode<synchronous>, transform_indices = @transform_1, window_bounds = array<i64: 16, 36>}, {pipeline_mode = #tpu.pipeline_mode<synchronous>, transform_indices = @transform_2, window_bounds = array<i64: 16, 1>}, {pipeline_mode = #tpu.pipeline_mode<synchronous>, transform_indices = @transform_3, window_bounds = array<i64: 9, 1, 256>}, {transform_indices = @transform_4, window_bounds = array<i64: 2, 16, 256>}]} {
    %c0 = arith.constant 0 : index
    %c0_0 = arith.constant 0 : index
    %c0_1 = arith.constant 0 : index
    %0 = vector.load %arg1[%c0, %c0_0, %c0_1] : memref<2x4x256xf32, #tpu.memory_space<vmem>>, vector<2x4x256xf32>
    %c0_2 = arith.constant 0 : index
    %c0_3 = arith.constant 0 : index
    %c0_4 = arith.constant 0 : index
    %1 = vector.load %arg4[%c0_2, %c0_3, %c0_4] : memref<9x1x256xf32, #tpu.memory_space<vmem>>, vector<9x1x256xf32>
    %2 = vector.extract_strided_slice %0 {offsets = [0, 0, 0], sizes = [1, 4, 256], strides = [1, 1, 1]} : vector<2x4x256xf32> to vector<1x4x256xf32>
    %3 = vector.shape_cast %2 : vector<1x4x256xf32> to vector<4x256xf32>
    %c17_i32 = arith.constant 17 : i32
    %4 = tpu.dynamic_rotate %3 by %c17_i32 dim 1 : vector<4x256xf32>, i32 -> vector<4x256xf32>
    %5 = vector.extract_strided_slice %1 {offsets = [0, 0, 0], sizes = [1, 1, 256], strides = [1, 1, 1]} : vector<9x1x256xf32> to vector<1x1x256xf32>
    %6 = vector.shape_cast %5 : vector<1x1x256xf32> to vector<1x256xf32>
    %7 = vector.broadcast %6 : vector<1x256xf32> to vector<4x256xf32>
    %8 = arith.mulf %4, %7 : vector<4x256xf32>
    %c0_5 = arith.constant 0 : index
    %c0_6 = arith.constant 0 : index
    %9 = vector.load %arg6[%c0_5, %c0_6] : memref<36x512xf32, #tpu.memory_space<vmem>>, vector<4x256xf32>
    tpu.vector_store %arg6[%c0_5, %c0_6], %8 {strides = array<i32>} : memref<36x512xf32, #tpu.memory_space<vmem>>, vector<4x256xf32>,
    %c16_i32 = arith.constant 16 : i32
    %10 = tpu.dynamic_rotate %3 by %c16_i32 dim 1 : vector<4x256xf32>, i32 -> vector<4x256xf32>
    %11 = vector.extract_strided_slice %1 {offsets = [1, 0, 0], sizes = [1, 1, 256], strides = [1, 1, 1]} : vector<9x1x256xf32> to vector<1x1x256xf32>
    %12 = vector.shape_cast %11 : vector<1x1x256xf32> to vector<1x256xf32>
    %13 = vector.broadcast %12 : vector<1x256xf32> to vector<4x256xf32>
    %14 = arith.mulf %10, %13 : vector<4x256xf32>
    %c4 = arith.constant 4 : index
    %c0_7 = arith.constant 0 : index
    %15 = vector.load %arg6[%c4, %c0_7] : memref<36x512xf32, #tpu.memory_space<vmem>>, vector<4x256xf32>
    tpu.vector_store %arg6[%c4, %c0_7], %14 {strides = array<i32>} : memref<36x512xf32, #tpu.memory_space<vmem>>, vector<4x256xf32>,
    %c15_i32 = arith.constant 15 : i32
    %16 = tpu.dynamic_rotate %3 by %c15_i32 dim 1 : vector<4x256xf32>, i32 -> vector<4x256xf32>
    %17 = vector.extract_strided_slice %1 {offsets = [2, 0, 0], sizes = [1, 1, 256], strides = [1, 1, 1]} : vector<9x1x256xf32> to vector<1x1x256xf32>
    %18 = vector.shape_cast %17 : vector<1x1x256xf32> to vector<1x256xf32>
    %19 = vector.broadcast %18 : vector<1x256xf32> to vector<4x256xf32>
    %20 = arith.mulf %16, %19 : vector<4x256xf32>
    %c8 = arith.constant 8 : index
    %c0_8 = arith.constant 0 : index
    %21 = vector.load %arg6[%c8, %c0_8] : memref<36x512xf32, #tpu.memory_space<vmem>>, vector<4x256xf32>
    tpu.vector_store %arg6[%c8, %c0_8], %20 {strides = array<i32>} : memref<36x512xf32, #tpu.memory_space<vmem>>, vector<4x256xf32>,
    %c1_i32 = arith.constant 1 : i32
    %22 = tpu.dynamic_rotate %3 by %c1_i32 dim 1 : vector<4x256xf32>, i32 -> vector<4x256xf32>
    %23 = vector.extract_strided_slice %1 {offsets = [3, 0, 0], sizes = [1, 1, 256], strides = [1, 1, 1]} : vector<9x1x256xf32> to vector<1x1x256xf32>
    %24 = vector.shape_cast %23 : vector<1x1x256xf32> to vector<1x256xf32>
    %25 = vector.broadcast %24 : vector<1x256xf32> to vector<4x256xf32>
    %26 = arith.mulf %22, %25 : vector<4x256xf32>
    %c12 = arith.constant 12 : index
    %c0_9 = arith.constant 0 : index
    %27 = vector.load %arg6[%c12, %c0_9] : memref<36x512xf32, #tpu.memory_space<vmem>>, vector<4x256xf32>
    tpu.vector_store %arg6[%c12, %c0_9], %26 {strides = array<i32>} : memref<36x512xf32, #tpu.memory_space<vmem>>, vector<4x256xf32>,
    %c16 = arith.constant 16 : index
    %c0_10 = arith.constant 0 : index
    %28 = vector.load %arg6[%c16, %c0_10] : memref<36x512xf32, #tpu.memory_space<vmem>>, vector<4x256xf32>
    tpu.vector_store %arg6[%c16, %c0_10], %3 {strides = array<i32>} : memref<36x512xf32, #tpu.memory_space<vmem>>, vector<4x256xf32>,
    %c255_i32 = arith.constant 255 : i32
    %29 = tpu.dynamic_rotate %3 by %c255_i32 dim 1 : vector<4x256xf32>, i32 -> vector<4x256xf32>
    %30 = vector.extract_strided_slice %1 {offsets = [5, 0, 0], sizes = [1, 1, 256], strides = [1, 1, 1]} : vector<9x1x256xf32> to vector<1x1x256xf32>
    %31 = vector.shape_cast %30 : vector<1x1x256xf32> to vector<1x256xf32>
    %32 = vector.broadcast %31 : vector<1x256xf32> to vector<4x256xf32>
    %33 = arith.mulf %29, %32 : vector<4x256xf32>
    %c20 = arith.constant 20 : index
    %c0_11 = arith.constant 0 : index
    %34 = vector.load %arg6[%c20, %c0_11] : memref<36x512xf32, #tpu.memory_space<vmem>>, vector<4x256xf32>
    tpu.vector_store %arg6[%c20, %c0_11], %33 {strides = array<i32>} : memref<36x512xf32, #tpu.memory_space<vmem>>, vector<4x256xf32>,
    %c241_i32 = arith.constant 241 : i32
    %35 = tpu.dynamic_rotate %3 by %c241_i32 dim 1 : vector<4x256xf32>, i32 -> vector<4x256xf32>
    %36 = vector.extract_strided_slice %1 {offsets = [6, 0, 0], sizes = [1, 1, 256], strides = [1, 1, 1]} : vector<9x1x256xf32> to vector<1x1x256xf32>
    %37 = vector.shape_cast %36 : vector<1x1x256xf32> to vector<1x256xf32>
    %38 = vector.broadcast %37 : vector<1x256xf32> to vector<4x256xf32>
    %39 = arith.mulf %35, %38 : vector<4x256xf32>
    %c24 = arith.constant 24 : index
    %c0_12 = arith.constant 0 : index
    %40 = vector.load %arg6[%c24, %c0_12] : memref<36x512xf32, #tpu.memory_space<vmem>>, vector<4x256xf32>
    tpu.vector_store %arg6[%c24, %c0_12], %39 {strides = array<i32>} : memref<36x512xf32, #tpu.memory_space<vmem>>, vector<4x256xf32>,
    %c240_i32 = arith.constant 240 : i32
    %41 = tpu.dynamic_rotate %3 by %c240_i32 dim 1 : vector<4x256xf32>, i32 -> vector<4x256xf32>
    %42 = vector.extract_strided_slice %1 {offsets = [7, 0, 0], sizes = [1, 1, 256], strides = [1, 1, 1]} : vector<9x1x256xf32> to vector<1x1x256xf32>
    %43 = vector.shape_cast %42 : vector<1x1x256xf32> to vector<1x256xf32>
    %44 = vector.broadcast %43 : vector<1x256xf32> to vector<4x256xf32>
    %45 = arith.mulf %41, %44 : vector<4x256xf32>
    %c28 = arith.constant 28 : index
    %c0_13 = arith.constant 0 : index
    %46 = vector.load %arg6[%c28, %c0_13] : memref<36x512xf32, #tpu.memory_space<vmem>>, vector<4x256xf32>
    tpu.vector_store %arg6[%c28, %c0_13], %45 {strides = array<i32>} : memref<36x512xf32, #tpu.memory_space<vmem>>, vector<4x256xf32>,
    %c239_i32 = arith.constant 239 : i32
    %47 = tpu.dynamic_rotate %3 by %c239_i32 dim 1 : vector<4x256xf32>, i32 -> vector<4x256xf32>
    %48 = vector.extract_strided_slice %1 {offsets = [8, 0, 0], sizes = [1, 1, 256], strides = [1, 1, 1]} : vector<9x1x256xf32> to vector<1x1x256xf32>
    %49 = vector.shape_cast %48 : vector<1x1x256xf32> to vector<1x256xf32>
    %50 = vector.broadcast %49 : vector<1x256xf32> to vector<4x256xf32>
    %51 = arith.mulf %47, %50 : vector<4x256xf32>
    %c32 = arith.constant 32 : index
    %c0_14 = arith.constant 0 : index
    %52 = vector.load %arg6[%c32, %c0_14] : memref<36x512xf32, #tpu.memory_space<vmem>>, vector<4x256xf32>
    tpu.vector_store %arg6[%c32, %c0_14], %51 {strides = array<i32>} : memref<36x512xf32, #tpu.memory_space<vmem>>, vector<4x256xf32>,
    %53 = vector.extract_strided_slice %0 {offsets = [1, 0, 0], sizes = [1, 4, 256], strides = [1, 1, 1]} : vector<2x4x256xf32> to vector<1x4x256xf32>
    %54 = vector.shape_cast %53 : vector<1x4x256xf32> to vector<4x256xf32>
    %c17_i32_15 = arith.constant 17 : i32
    %55 = tpu.dynamic_rotate %54 by %c17_i32_15 dim 1 : vector<4x256xf32>, i32 -> vector<4x256xf32>
    %56 = vector.extract_strided_slice %1 {offsets = [0, 0, 0], sizes = [1, 1, 256], strides = [1, 1, 1]} : vector<9x1x256xf32> to vector<1x1x256xf32>
    %57 = vector.shape_cast %56 : vector<1x1x256xf32> to vector<1x256xf32>
    %58 = vector.broadcast %57 : vector<1x256xf32> to vector<4x256xf32>
    %59 = arith.mulf %55, %58 : vector<4x256xf32>
    %c0_16 = arith.constant 0 : index
    %c256 = arith.constant 256 : index
    %60 = vector.load %arg6[%c0_16, %c256] : memref<36x512xf32, #tpu.memory_space<vmem>>, vector<4x256xf32>
    tpu.vector_store %arg6[%c0_16, %c256], %59 {strides = array<i32>} : memref<36x512xf32, #tpu.memory_space<vmem>>, vector<4x256xf32>,
    %c16_i32_17 = arith.constant 16 : i32
    %61 = tpu.dynamic_rotate %54 by %c16_i32_17 dim 1 : vector<4x256xf32>, i32 -> vector<4x256xf32>
    %62 = vector.extract_strided_slice %1 {offsets = [1, 0, 0], sizes = [1, 1, 256], strides = [1, 1, 1]} : vector<9x1x256xf32> to vector<1x1x256xf32>
    %63 = vector.shape_cast %62 : vector<1x1x256xf32> to vector<1x256xf32>
    %64 = vector.broadcast %63 : vector<1x256xf32> to vector<4x256xf32>
    %65 = arith.mulf %61, %64 : vector<4x256xf32>
    %c4_18 = arith.constant 4 : index
    %c256_19 = arith.constant 256 : index
    %66 = vector.load %arg6[%c4_18, %c256_19] : memref<36x512xf32, #tpu.memory_space<vmem>>, vector<4x256xf32>
    tpu.vector_store %arg6[%c4_18, %c256_19], %65 {strides = array<i32>} : memref<36x512xf32, #tpu.memory_space<vmem>>, vector<4x256xf32>,
    %c15_i32_20 = arith.constant 15 : i32
    %67 = tpu.dynamic_rotate %54 by %c15_i32_20 dim 1 : vector<4x256xf32>, i32 -> vector<4x256xf32>
    %68 = vector.extract_strided_slice %1 {offsets = [2, 0, 0], sizes = [1, 1, 256], strides = [1, 1, 1]} : vector<9x1x256xf32> to vector<1x1x256xf32>
    %69 = vector.shape_cast %68 : vector<1x1x256xf32> to vector<1x256xf32>
    %70 = vector.broadcast %69 : vector<1x256xf32> to vector<4x256xf32>
    %71 = arith.mulf %67, %70 : vector<4x256xf32>
    %c8_21 = arith.constant 8 : index
    %c256_22 = arith.constant 256 : index
    %72 = vector.load %arg6[%c8_21, %c256_22] : memref<36x512xf32, #tpu.memory_space<vmem>>, vector<4x256xf32>
    tpu.vector_store %arg6[%c8_21, %c256_22], %71 {strides = array<i32>} : memref<36x512xf32, #tpu.memory_space<vmem>>, vector<4x256xf32>,
    %c1_i32_23 = arith.constant 1 : i32
    %73 = tpu.dynamic_rotate %54 by %c1_i32_23 dim 1 : vector<4x256xf32>, i32 -> vector<4x256xf32>
    %74 = vector.extract_strided_slice %1 {offsets = [3, 0, 0], sizes = [1, 1, 256], strides = [1, 1, 1]} : vector<9x1x256xf32> to vector<1x1x256xf32>
    %75 = vector.shape_cast %74 : vector<1x1x256xf32> to vector<1x256xf32>
    %76 = vector.broadcast %75 : vector<1x256xf32> to vector<4x256xf32>
    %77 = arith.mulf %73, %76 : vector<4x256xf32>
    %c12_24 = arith.constant 12 : index
    %c256_25 = arith.constant 256 : index
    %78 = vector.load %arg6[%c12_24, %c256_25] : memref<36x512xf32, #tpu.memory_space<vmem>>, vector<4x256xf32>
    tpu.vector_store %arg6[%c12_24, %c256_25], %77 {strides = array<i32>} : memref<36x512xf32, #tpu.memory_space<vmem>>, vector<4x256xf32>,
    %c16_26 = arith.constant 16 : index
    %c256_27 = arith.constant 256 : index
    %79 = vector.load %arg6[%c16_26, %c256_27] : memref<36x512xf32, #tpu.memory_space<vmem>>, vector<4x256xf32>
    tpu.vector_store %arg6[%c16_26, %c256_27], %54 {strides = array<i32>} : memref<36x512xf32, #tpu.memory_space<vmem>>, vector<4x256xf32>,
    %c255_i32_28 = arith.constant 255 : i32
    %80 = tpu.dynamic_rotate %54 by %c255_i32_28 dim 1 : vector<4x256xf32>, i32 -> vector<4x256xf32>
    %81 = vector.extract_strided_slice %1 {offsets = [5, 0, 0], sizes = [1, 1, 256], strides = [1, 1, 1]} : vector<9x1x256xf32> to vector<1x1x256xf32>
    %82 = vector.shape_cast %81 : vector<1x1x256xf32> to vector<1x256xf32>
    %83 = vector.broadcast %82 : vector<1x256xf32> to vector<4x256xf32>
    %84 = arith.mulf %80, %83 : vector<4x256xf32>
    %c20_29 = arith.constant 20 : index
    %c256_30 = arith.constant 256 : index
    %85 = vector.load %arg6[%c20_29, %c256_30] : memref<36x512xf32, #tpu.memory_space<vmem>>, vector<4x256xf32>
    tpu.vector_store %arg6[%c20_29, %c256_30], %84 {strides = array<i32>} : memref<36x512xf32, #tpu.memory_space<vmem>>, vector<4x256xf32>,
    %c241_i32_31 = arith.constant 241 : i32
    %86 = tpu.dynamic_rotate %54 by %c241_i32_31 dim 1 : vector<4x256xf32>, i32 -> vector<4x256xf32>
    %87 = vector.extract_strided_slice %1 {offsets = [6, 0, 0], sizes = [1, 1, 256], strides = [1, 1, 1]} : vector<9x1x256xf32> to vector<1x1x256xf32>
    %88 = vector.shape_cast %87 : vector<1x1x256xf32> to vector<1x256xf32>
    %89 = vector.broadcast %88 : vector<1x256xf32> to vector<4x256xf32>
    %90 = arith.mulf %86, %89 : vector<4x256xf32>
    %c24_32 = arith.constant 24 : index
    %c256_33 = arith.constant 256 : index
    %91 = vector.load %arg6[%c24_32, %c256_33] : memref<36x512xf32, #tpu.memory_space<vmem>>, vector<4x256xf32>
    tpu.vector_store %arg6[%c24_32, %c256_33], %90 {strides = array<i32>} : memref<36x512xf32, #tpu.memory_space<vmem>>, vector<4x256xf32>,
    %c240_i32_34 = arith.constant 240 : i32
    %92 = tpu.dynamic_rotate %54 by %c240_i32_34 dim 1 : vector<4x256xf32>, i32 -> vector<4x256xf32>
    %93 = vector.extract_strided_slice %1 {offsets = [7, 0, 0], sizes = [1, 1, 256], strides = [1, 1, 1]} : vector<9x1x256xf32> to vector<1x1x256xf32>
    %94 = vector.shape_cast %93 : vector<1x1x256xf32> to vector<1x256xf32>
    %95 = vector.broadcast %94 : vector<1x256xf32> to vector<4x256xf32>
    %96 = arith.mulf %92, %95 : vector<4x256xf32>
    %c28_35 = arith.constant 28 : index
    %c256_36 = arith.constant 256 : index
    %97 = vector.load %arg6[%c28_35, %c256_36] : memref<36x512xf32, #tpu.memory_space<vmem>>, vector<4x256xf32>
    tpu.vector_store %arg6[%c28_35, %c256_36], %96 {strides = array<i32>} : memref<36x512xf32, #tpu.memory_space<vmem>>, vector<4x256xf32>,
    %c239_i32_37 = arith.constant 239 : i32
    %98 = tpu.dynamic_rotate %54 by %c239_i32_37 dim 1 : vector<4x256xf32>, i32 -> vector<4x256xf32>
    %99 = vector.extract_strided_slice %1 {offsets = [8, 0, 0], sizes = [1, 1, 256], strides = [1, 1, 1]} : vector<9x1x256xf32> to vector<1x1x256xf32>
    %100 = vector.shape_cast %99 : vector<1x1x256xf32> to vector<1x256xf32>
    %101 = vector.broadcast %100 : vector<1x256xf32> to vector<4x256xf32>
    %102 = arith.mulf %98, %101 : vector<4x256xf32>
    %c32_38 = arith.constant 32 : index
    %c256_39 = arith.constant 256 : index
    %103 = vector.load %arg6[%c32_38, %c256_39] : memref<36x512xf32, #tpu.memory_space<vmem>>, vector<4x256xf32>
    tpu.vector_store %arg6[%c32_38, %c256_39], %102 {strides = array<i32>} : memref<36x512xf32, #tpu.memory_space<vmem>>, vector<4x256xf32>,
    %c0_40 = arith.constant 0 : index
    %c0_41 = arith.constant 0 : index
    %104 = vector.load %arg2[%c0_40, %c0_41] : memref<16x36xf32, #tpu.memory_space<vmem>>, vector<16x36xf32>
    %c0_42 = arith.constant 0 : index
    %c0_43 = arith.constant 0 : index
    %105 = vector.load %arg6[%c0_42, %c0_43] : memref<36x512xf32, #tpu.memory_space<vmem>>, vector<36x512xf32>
    %cst = arith.constant dense<0.000000e+00> : vector<16x512xf32>
    %106 = tpu.matmul %104, %105, %cst {dimension_numbers = #tpu.dot_dimension_numbers<[1], [0], [0], [1], [0, 0, 1, 1], [], []>} : vector<16x36xf32>, vector<36x512xf32>, vector<16x512xf32> -> vector<16x512xf32>
    %c0_44 = arith.constant 0 : index
    %c0_45 = arith.constant 0 : index
    %107 = vector.load %arg3[%c0_44, %c0_45] : memref<16x1xf32, #tpu.memory_space<vmem>>, vector<16x1xf32>
    %108 = vector.broadcast %107 : vector<16x1xf32> to vector<16x512xf32>
    %109 = arith.addf %106, %108 : vector<16x512xf32>
    %110 = vector.extract_strided_slice %109 {offsets = [0, 0], sizes = [16, 256], strides = [1, 1]} : vector<16x512xf32> to vector<16x256xf32>
    %c0_46 = arith.constant 0 : index
    %c0_47 = arith.constant 0 : index
    %c0_48 = arith.constant 0 : index
    %111 = vector.load %arg5[%c0_46, %c0_47, %c0_48] : memref<2x16x256xf32, #tpu.memory_space<vmem>>, vector<1x16x256xf32>
    %112 = vector.shape_cast %111 : vector<1x16x256xf32> to vector<16x256xf32>
    %113 = vector.shape_cast %110 : vector<16x256xf32> to vector<1x16x256xf32>
    tpu.vector_store %arg5[%c0_46, %c0_47, %c0_48], %113 {strides = array<i32>} : memref<2x16x256xf32, #tpu.memory_space<vmem>>, vector<1x16x256xf32>,
    %114 = vector.extract_strided_slice %109 {offsets = [0, 256], sizes = [16, 256], strides = [1, 1]} : vector<16x512xf32> to vector<16x256xf32>
    %c1 = arith.constant 1 : index
    %c0_49 = arith.constant 0 : index
    %c0_50 = arith.constant 0 : index
    %115 = vector.load %arg5[%c1, %c0_49, %c0_50] : memref<2x16x256xf32, #tpu.memory_space<vmem>>, vector<1x16x256xf32>
    %116 = vector.shape_cast %115 : vector<1x16x256xf32> to vector<16x256xf32>
    %117 = vector.shape_cast %114 : vector<16x256xf32> to vector<1x16x256xf32>
    tpu.vector_store %arg5[%c1, %c0_49, %c0_50], %117 {strides = array<i32>} : memref<2x16x256xf32, #tpu.memory_space<vmem>>, vector<1x16x256xf32>,
    return
  }
  func.func @transform_0(%arg0: i32) -> (i32, i32, i32) {
    %c0_i32 = arith.constant 0 : i32
    %c0_i32_0 = arith.constant 0 : i32
    %c0_i32_1 = arith.constant 0 : i32
    return %arg0, %c0_i32, %c0_i32_0 : i32, i32, i32
  }
  func.func @transform_1(%arg0: i32) -> (i32, i32) {
    %c0_i32 = arith.constant 0 : i32
    %c0_i32_0 = arith.constant 0 : i32
    %c0_i32_1 = arith.constant 0 : i32
    return %c0_i32, %c0_i32_0 : i32, i32
  }
  func.func @transform_2(%arg0: i32) -> (i32, i32) {
    %c0_i32 = arith.constant 0 : i32
    %c0_i32_0 = arith.constant 0 : i32
    %c0_i32_1 = arith.constant 0 : i32
    return %c0_i32, %c0_i32_0 : i32, i32
  }
  func.func @transform_3(%arg0: i32) -> (i32, i32, i32) {
    %c0_i32 = arith.constant 0 : i32
    %c0_i32_0 = arith.constant 0 : i32
    %c0_i32_1 = arith.constant 0 : i32
    %c0_i32_2 = arith.constant 0 : i32
    return %c0_i32, %c0_i32_0, %c0_i32_1 : i32, i32, i32
  }
  func.func @transform_4(%arg0: i32) -> (i32, i32, i32) {
    %c0_i32 = arith.constant 0 : i32
    %c0_i32_0 = arith.constant 0 : i32
    %c0_i32_1 = arith.constant 0 : i32
    return %arg0, %c0_i32, %c0_i32_0 : i32, i32, i32
  }
}

</mosaic_0001>

<llo_original>
// kernel: pixel_shuffle_pack.1
$region0: #{pixel_shuffle_pack.1}
  #allocation0 [shape = 'u32[]', space=smem, size = 0x4, offset = 0x4, fixed_abs, tag = 'smem constant byte address 0x4 - core index']
  #allocation1 [shape = 'u32[144,128]{1,0:T(1,128)}', space=vmem, size = 0x12000, scoped, tag = 'internal scratch']
  #allocation2 [shape = 'f32[36,512]{1,0:T(8,128)}', space=vmem, size = 0x14000, scoped, tag = 'scratch operand']
  %s0 = inlined_call_operand.vmem [shape: f32[2,4,256], index: 0, kind: input, shape index: {}]
  %s1 = inlined_call_operand.vmem [shape: f32[16,36], index: 1, kind: input, shape index: {}]
  %s2 = inlined_call_operand.vmem [shape: f32[16,1], index: 2, kind: input, shape index: {}]
  %s3 = inlined_call_operand.vmem [shape: f32[9,1,256], index: 3, kind: input, shape index: {}]
  %s4 = inlined_call_operand.vmem [shape: f32[2,16,256], index: 4, kind: output, shape index: {}]
  %s5 = sld [smem:[#allocation0]]
  $region26: #{pixel_shuffle_pack.1} parent=0
    _
  %s7 = ssub.s32 1, %s5
  %s8 = scalar_select 0, %s7, %s5
  // Predicated region
  $region2: #{pixel_shuffle_pack.1} parent=0 // pred_check
    _
  $region3: #{pixel_shuffle_pack.1} parent=0 // pred_check_branch
    %10 = sbr.rel (0) target = $region5
  $region4: #{pixel_shuffle_pack.1} parent=0 // pred_region
    _
  $region5: #{pixel_shuffle_pack.1} parent=0 // pred_fallthru
    _
  // Predicated region
  $region6: #{pixel_shuffle_pack.1} parent=0 // pred_check
    _
  $region7: #{pixel_shuffle_pack.1} parent=0 // pred_check_branch
    %12 = sbr.rel (0) target = $region9
  $region8: #{pixel_shuffle_pack.1} parent=0 // pred_region
    _
  $region9: #{pixel_shuffle_pack.1} parent=0 // pred_fallthru
    _
  // Predicated region
  $region10: #{pixel_shuffle_pack.1} parent=0 // pred_check
    _
  $region11: #{pixel_shuffle_pack.1} parent=0 // pred_check_branch
    %14 = sbr.rel (0) target = $region13
  $region12: #{pixel_shuffle_pack.1} parent=0 // pred_region
    _
  $region13: #{pixel_shuffle_pack.1} parent=0 // pred_fallthru
    _
  // Predicated region
  $region14: #{pixel_shuffle_pack.1} parent=0 // pred_check
    _
  $region15: #{pixel_shuffle_pack.1} parent=0 // pred_check_branch
    %16 = sbr.rel (0) target = $region17
  $region16: #{pixel_shuffle_pack.1} parent=0 // pred_region
    _
  $region17: #{pixel_shuffle_pack.1} parent=0 // pred_fallthru
    _
  %v17 = vld [vmem:[%s0] sm:$0xff]
  %v18 = vld [vmem:[%s0 + $0x8] sm:$0xff]
  %v19 = vld [vmem:[%s3] sm:$0x3]
  %v20 = vld [vmem:[%s3 + $0x2] sm:$0x3]
  %v21 = vld [vmem:[%s3 + $0x4] sm:$0x3]
  %v22 = vld [vmem:[%s3 + $0x6] sm:$0x3]
  %v23 = vld [vmem:[%s3 + $0xa] sm:$0x3]
  %v24 = vld [vmem:[%s3 + $0xc] sm:$0x3]
  %v25 = vld [vmem:[%s3 + $0xe] sm:$0x3]
  %v26 = vld [vmem:[%s3 + $0x10] sm:$0x3]
  %v28 = vcombine.high %v17, %v17
  %30 = vrot.lane.b32.xlu0 %v17, 17
  %v31 = vpop.permute.xlu0 %30
  %32 = vrot.lane.b32.xlu0 %v28, 17
  %v33 = vpop.permute.xlu0 %32
  %v34 = vlaneseq
  %v35 = vand.u32 %v34, 127
  %vm36 = vcmp.lt.s32.totalorder %v35, 17
  %v37 = vsel %vm36, %v31, %v33
  %v38 = vsel %vm36, %v33, %v31
  %v40 = vlaneseq
  %v41 = vshrl.u32 %v40, 7
  %v42 = vsub.s32 0, %v41
  %v43 = vrot.slane %v19, %v42
  %v44 = vlaneseq
  %v45 = vshrl.u32 %v44, 7
  %v46 = vsub.s32 1, %v45
  %v47 = vrot.slane %v19, %v46
  %v50 = vmul.f32 %v38, %v43
  %v51 = vmul.f32 %v37, %v47
  %52 = vst [vmem:[#allocation2] sm:$0xf] %v50
  %53 = vst [vmem:[#allocation2 + $0x8] sm:$0xf] %v51
  %54 = vrot.lane.b32.xlu0 %v17, 16
  %v55 = vpop.permute.xlu0 %54
  %56 = vrot.lane.b32.xlu0 %v28, 16
  %v57 = vpop.permute.xlu0 %56
  %vm58 = vcmp.lt.s32.totalorder %v35, 16
  %v59 = vsel %vm58, %v55, %v57
  %v60 = vsel %vm58, %v57, %v55
  %v62 = vlaneseq
  %v63 = vshrl.u32 %v62, 7
  %v64 = vsub.s32 0, %v63
  %v65 = vrot.slane %v20, %v64
  %v66 = vlaneseq
  %v67 = vshrl.u32 %v66, 7
  %v68 = vsub.s32 1, %v67
  %v69 = vrot.slane %v20, %v68
  %v72 = vmul.f32 %v60, %v65
  %v73 = vmul.f32 %v59, %v69
  %v76 = vrot.slane %v72, 4
  %v77 = vrot.slane %v73, 4
  %80 = vst [vmem:[#allocation2] sm:$0xf0] %v76
  %81 = vst [vmem:[#allocation2 + $0x8] sm:$0xf0] %v77
  %82 = vrot.lane.b32.xlu0 %v17, 15
  %v83 = vpop.permute.xlu0 %82
  %84 = vrot.lane.b32.xlu0 %v28, 15
  %v85 = vpop.permute.xlu0 %84
  %vm86 = vcmp.lt.s32.totalorder %v35, 15
  %v87 = vsel %vm86, %v83, %v85
  %v88 = vsel %vm86, %v85, %v83
  %v90 = vlaneseq
  %v91 = vshrl.u32 %v90, 7
  %v92 = vsub.s32 0, %v91
  %v93 = vrot.slane %v21, %v92
  %v94 = vlaneseq
  %v95 = vshrl.u32 %v94, 7
  %v96 = vsub.s32 1, %v95
  %v97 = vrot.slane %v21, %v96
  %v100 = vmul.f32 %v88, %v93
  %v101 = vmul.f32 %v87, %v97
  %102 = vst [vmem:[#allocation2 + $0x20] sm:$0xf] %v100
  %103 = vst [vmem:[#allocation2 + $0x28] sm:$0xf] %v101
  %104 = vrot.lane.b32.xlu0 %v17, 1
  %v105 = vpop.permute.xlu0 %104
  %106 = vrot.lane.b32.xlu0 %v28, 1
  %v107 = vpop.permute.xlu0 %106
  %vm108 = vcmp.lt.s32.totalorder %v35, 1
  %v109 = vsel %vm108, %v105, %v107
  %v110 = vsel %vm108, %v107, %v105
  %v112 = vlaneseq
  %v113 = vshrl.u32 %v112, 7
  %v114 = vsub.s32 0, %v113
  %v115 = vrot.slane %v22, %v114
  %v116 = vlaneseq
  %v117 = vshrl.u32 %v116, 7
  %v118 = vsub.s32 1, %v117
  %v119 = vrot.slane %v22, %v118
  %v122 = vmul.f32 %v110, %v115
  %v123 = vmul.f32 %v109, %v119
  %v126 = vrot.slane %v122, 4
  %v127 = vrot.slane %v123, 4
  %130 = vst [vmem:[#allocation2 + $0x20] sm:$0xf0] %v126
  %131 = vst [vmem:[#allocation2 + $0x28] sm:$0xf0] %v127
  %132 = vst [vmem:[#allocation2 + $0x40] sm:$0xf] %v17
  %133 = vst [vmem:[#allocation2 + $0x48] sm:$0xf] %v28
  %134 = vrot.lane.b32.xlu0 %v17, 127
  %v135 = vpop.permute.xlu0 %134
  %136 = vrot.lane.b32.xlu0 %v28, 127
  %v137 = vpop.permute.xlu0 %136
  %vm138 = vcmp.lt.s32.totalorder %v35, 127
  %v139 = vsel %vm138, %v135, %v137
  %v140 = vsel %vm138, %v137, %v135
  %v142 = vlaneseq
  %v143 = vshrl.u32 %v142, 7
  %v144 = vsub.s32 0, %v143
  %v145 = vrot.slane %v23, %v144
  %v146 = vlaneseq
  %v147 = vshrl.u32 %v146, 7
  %v148 = vsub.s32 1, %v147
  %v149 = vrot.slane %v23, %v148
  %v152 = vmul.f32 %v139, %v145
  %v153 = vmul.f32 %v140, %v149
  %v156 = vrot.slane %v152, 4
  %v157 = vrot.slane %v153, 4
  %160 = vst [vmem:[#allocation2 + $0x40] sm:$0xf0] %v156
  %161 = vst [vmem:[#allocation2 + $0x48] sm:$0xf0] %v157
  %162 = vrot.lane.b32.xlu0 %v17, 113
  %v163 = vpop.permute.xlu0 %162
  %164 = vrot.lane.b32.xlu0 %v28, 113
  %v165 = vpop.permute.xlu0 %164
  %vm166 = vcmp.lt.s32.totalorder %v35, 113
  %v167 = vsel %vm166, %v163, %v165
  %v168 = vsel %vm166, %v165, %v163
  %v170 = vlaneseq
  %v171 = vshrl.u32 %v170, 7
  %v172 = vsub.s32 0, %v171
  %v173 = vrot.slane %v24, %v172
  %v174 = vlaneseq
  %v175 = vshrl.u32 %v174, 7
  %v176 = vsub.s32 1, %v175
  %v177 = vrot.slane %v24, %v176
  %v180 = vmul.f32 %v167, %v173
  %v181 = vmul.f32 %v168, %v177
  %182 = vst [vmem:[#allocation2 + $0x60] sm:$0xf] %v180
  %183 = vst [vmem:[#allocation2 + $0x68] sm:$0xf] %v181
  %184 = vrot.lane.b32.xlu0 %v17, 112
  %v185 = vpop.permute.xlu0 %184
  %186 = vrot.lane.b32.xlu0 %v28, 112
  %v187 = vpop.permute.xlu0 %186
  %vm188 = vcmp.lt.s32.totalorder %v35, 112
  %v189 = vsel %vm188, %v185, %v187
  %v190 = vsel %vm188, %v187, %v185
  %v192 = vlaneseq
  %v193 = vshrl.u32 %v192, 7
  %v194 = vsub.s32 0, %v193
  %v195 = vrot.slane %v25, %v194
  %v196 = vlaneseq
  %v197 = vshrl.u32 %v196, 7
  %v198 = vsub.s32 1, %v197
  %v199 = vrot.slane %v25, %v198
  %v202 = vmul.f32 %v189, %v195
  %v203 = vmul.f32 %v190, %v199
  %v206 = vrot.slane %v202, 4
  %v207 = vrot.slane %v203, 4
  %210 = vst [vmem:[#allocation2 + $0x60] sm:$0xf0] %v206
  %211 = vst [vmem:[#allocation2 + $0x68] sm:$0xf0] %v207
  %212 = vrot.lane.b32.xlu0 %v17, 111
  %v213 = vpop.permute.xlu0 %212
  %214 = vrot.lane.b32.xlu0 %v28, 111
  %v215 = vpop.permute.xlu0 %214
  %vm216 = vcmp.lt.s32.totalorder %v35, 111
  %v217 = vsel %vm216, %v213, %v215
  %v218 = vsel %vm216, %v215, %v213
  %v220 = vlaneseq
  %v221 = vshrl.u32 %v220, 7
  %v222 = vsub.s32 0, %v221
  %v223 = vrot.slane %v26, %v222
  %v224 = vlaneseq
  %v225 = vshrl.u32 %v224, 7
  %v226 = vsub.s32 1, %v225
  %v227 = vrot.slane %v26, %v226
  %v230 = vmul.f32 %v217, %v223
  %v231 = vmul.f32 %v218, %v227
  %232 = vst [vmem:[#allocation2 + $0x80] sm:$0xf] %v230
  %233 = vst [vmem:[#allocation2 + $0x88] sm:$0xf] %v231
  %v235 = vcombine.high %v18, %v18
  %237 = vrot.lane.b32.xlu0 %v18, 17
  %v238 = vpop.permute.xlu0 %237
  %239 = vrot.lane.b32.xlu0 %v235, 17
  %v240 = vpop.permute.xlu0 %239
  %v241 = vsel %vm36, %v238, %v240
  %v242 = vsel %vm36, %v240, %v238
  %v243 = vmul.f32 %v242, %v43
  %v244 = vmul.f32 %v241, %v47
  %245 = vst [vmem:[#allocation2 + $0x10] sm:$0xf] %v243
  %246 = vst [vmem:[#allocation2 + $0x18] sm:$0xf] %v244
  %247 = vrot.lane.b32.xlu0 %v18, 16
  %v248 = vpop.permute.xlu0 %247
  %249 = vrot.lane.b32.xlu0 %v235, 16
  %v250 = vpop.permute.xlu0 %249
  %v251 = vsel %vm58, %v248, %v250
  %v252 = vsel %vm58, %v250, %v248
  %v253 = vmul.f32 %v252, %v65
  %v254 = vmul.f32 %v251, %v69
  %v257 = vrot.slane %v253, 4
  %v258 = vrot.slane %v254, 4
  %261 = vst [vmem:[#allocation2 + $0x10] sm:$0xf0] %v257
  %262 = vst [vmem:[#allocation2 + $0x18] sm:$0xf0] %v258
  %263 = vrot.lane.b32.xlu0 %v18, 15
  %v264 = vpop.permute.xlu0 %263
  %265 = vrot.lane.b32.xlu0 %v235, 15
  %v266 = vpop.permute.xlu0 %265
  %v267 = vsel %vm86, %v264, %v266
  %v268 = vsel %vm86, %v266, %v264
  %v269 = vmul.f32 %v268, %v93
  %v270 = vmul.f32 %v267, %v97
  %271 = vst [vmem:[#allocation2 + $0x30] sm:$0xf] %v269
  %272 = vst [vmem:[#allocation2 + $0x38] sm:$0xf] %v270
  %273 = vrot.lane.b32.xlu0 %v18, 1
  %v274 = vpop.permute.xlu0 %273
  %275 = vrot.lane.b32.xlu0 %v235, 1
  %v276 = vpop.permute.xlu0 %275
  %v277 = vsel %vm108, %v274, %v276
  %v278 = vsel %vm108, %v276, %v274
  %v279 = vmul.f32 %v278, %v115
  %v280 = vmul.f32 %v277, %v119
  %v283 = vrot.slane %v279, 4
  %v284 = vrot.slane %v280, 4
  %287 = vst [vmem:[#allocation2 + $0x30] sm:$0xf0] %v283
  %288 = vst [vmem:[#allocation2 + $0x38] sm:$0xf0] %v284
  %289 = vst [vmem:[#allocation2 + $0x50] sm:$0xf] %v18
  %290 = vst [vmem:[#allocation2 + $0x58] sm:$0xf] %v235
  %291 = vrot.lane.b32.xlu0 %v18, 127
  %v292 = vpop.permute.xlu0 %291
  %293 = vrot.lane.b32.xlu0 %v235, 127
  %v294 = vpop.permute.xlu0 %293
  %v295 = vsel %vm138, %v292, %v294
  %v296 = vsel %vm138, %v294, %v292
  %v297 = vmul.f32 %v295, %v145
  %v298 = vmul.f32 %v296, %v149
  %v301 = vrot.slane %v297, 4
  %v302 = vrot.slane %v298, 4
  %305 = vst [vmem:[#allocation2 + $0x50] sm:$0xf0] %v301
  %306 = vst [vmem:[#allocation2 + $0x58] sm:$0xf0] %v302
  %307 = vrot.lane.b32.xlu0 %v18, 113
  %v308 = vpop.permute.xlu0 %307
  %309 = vrot.lane.b32.xlu0 %v235, 113
  %v310 = vpop.permute.xlu0 %309
  %v311 = vsel %vm166, %v308, %v310
  %v312 = vsel %vm166, %v310, %v308
  %v313 = vmul.f32 %v311, %v173
  %v314 = vmul.f32 %v312, %v177
  %315 = vst [vmem:[#allocation2 + $0x70] sm:$0xf] %v313
  %316 = vst [vmem:[#allocation2 + $0x78] sm:$0xf] %v314
  %317 = vrot.lane.b32.xlu0 %v18, 112
  %v318 = vpop.permute.xlu0 %317
  %319 = vrot.lane.b32.xlu0 %v235, 112
  %v320 = vpop.permute.xlu0 %319
  %v321 = vsel %vm188, %v318, %v320
  %v322 = vsel %vm188, %v320, %v318
  %v323 = vmul.f32 %v321, %v195
  %v324 = vmul.f32 %v322, %v199
  %v327 = vrot.slane %v323, 4
  %v328 = vrot.slane %v324, 4
  %331 = vst [vmem:[#allocation2 + $0x70] sm:$0xf0] %v327
  %332 = vst [vmem:[#allocation2 + $0x78] sm:$0xf0] %v328
  %333 = vrot.lane.b32.xlu0 %v18, 111
  %v334 = vpop.permute.xlu0 %333
  %335 = vrot.lane.b32.xlu0 %v235, 111
  %v336 = vpop.permute.xlu0 %335
  %v337 = vsel %vm216, %v334, %v336
  %v338 = vsel %vm216, %v336, %v334
  %v339 = vmul.f32 %v337, %v223
  %v340 = vmul.f32 %v338, %v227
  %341 = vst [vmem:[#allocation2 + $0x90] sm:$0xf] %v339
  %342 = vst [vmem:[#allocation2 + $0x98] sm:$0xf] %v340
  %v343 = vld [vmem:[%s1] sm:$0xff]
  %v344 = vld [vmem:[%s1 + $0x8] sm:$0xff]
  %v345 = vld [vmem:[#allocation2] sm:$0xff]
  %v346 = vld [vmem:[#allocation2 + $0x8] sm:$0xff]
  %v347 = vld [vmem:[#allocation2 + $0x10] sm:$0xff]
  %v348 = vld [vmem:[#allocation2 + $0x18] sm:$0xff]
  %v349 = vld [vmem:[#allocation2 + $0x20] sm:$0xff]
  %v350 = vld [vmem:[#allocation2 + $0x28] sm:$0xff]
  %v351 = vld [vmem:[#allocation2 + $0x30] sm:$0xff]
  %v352 = vld [vmem:[#allocation2 + $0x38] sm:$0xff]
  %v353 = vld [vmem:[#allocation2 + $0x40] sm:$0xff]
  %v354 = vld [vmem:[#allocation2 + $0x48] sm:$0xff]
  %v355 = vld [vmem:[#allocation2 + $0x50] sm:$0xff]
  %v356 = vld [vmem:[#allocation2 + $0x58] sm:$0xff]
  %v357 = vld [vmem:[#allocation2 + $0x60] sm:$0xff]
  %v358 = vld [vmem:[#allocation2 + $0x68] sm:$0xff]
  %v359 = vld [vmem:[#allocation2 + $0x70] sm:$0xff]
  %v360 = vld [vmem:[#allocation2 + $0x78] sm:$0xff]
  %v361 = vld [vmem:[#allocation2 + $0x80] sm:$0xf]
  %v362 = vld [vmem:[#allocation2 + $0x88] sm:$0xf]
  %v363 = vld [vmem:[#allocation2 + $0x90] sm:$0xf]
  %v364 = vld [vmem:[#allocation2 + $0x98] sm:$0xf]
  %v365 = vld [vmem:[%s2] sm:$0xff]
  %v366 = vld [vmem:[%s2 + $0x8] sm:$0xff]
  %368 = vset.pattern.permute.xlu0 0
  %369 = vperm.xlu0 %368, %v365
  %v370 = vpop.permute.xlu0 %369
  %373 = vset.pattern.permute.xlu0 0
  %374 = vperm.xlu0 %373, %v366
  %v375 = vpop.permute.xlu0 %374
  %vm377 = vcmask 293888
  %v379 = vsel %vm377, %v343, 0
  %v382 = vsel %vm377, %v344, 0
  %vm384 = vcmask 1043456
  %v386 = vsel %vm384, %v361, 0
  %v389 = vsel %vm384, %v362, 0
  %v392 = vsel %vm384, %v363, 0
  %v395 = vsel %vm384, %v364, 0
  %397 = vmatprep.subr.mxu0 %v346
  %398 = vmatpush1.msra.mxu0 %v345
  %399 = vmatprep.subr.mxu0 %v350
  %400 = vmatpush1.msra.mxu0 %v349
  %401 = vmatprep.subr.mxu0 %v354
  %402 = vmatpush1.msra.mxu0 %v353
  %403 = vmatprep.subr.mxu0 %v358
  %404 = vmatpush1.msra.mxu0 %v357
  %405 = vmatprep.subr.mxu0 %v389
  %406 = vmatpush1.msra.mxu0 %v386
  %407 = vmatprep.subr.mxu0 0.0
  %408 = vmatpush1.msra.mxu0 0.0
  %409 = vmatprep.subr.mxu0 0.0
  %410 = vmatpush1.msra.mxu0 0.0
  %411 = vmatprep.subr.mxu0 0.0
  %412 = vmatpush1.msra.mxu0 0.0
  %413 = vmatprep.subr.mxu0 0.0
  %414 = vmatpush1.msra.mxu0 0.0
  %415 = vmatprep.subr.mxu0 0.0
  %416 = vmatpush1.msra.mxu0 0.0
  %417 = vmatprep.subr.mxu0 0.0
  %418 = vmatpush1.msra.mxu0 0.0
  %419 = vmatprep.subr.mxu0 0.0
  %420 = vmatpush1.msra.mxu0 0.0
  %421 = vmatprep.subr.mxu0 0.0
  %422 = vmatpush1.msra.mxu0 0.0
  %423 = vmatprep.subr.mxu0 0.0
  %424 = vmatpush1.msra.mxu0 0.0
  %425 = vmatprep.subr.mxu0 0.0
  %426 = vmatpush1.msra.mxu0 0.0
  %427 = vmatprep.subr.mxu0 0.0
  %428 = vmatpush1.msra.mxu0 0.0
  %429 = vmatprep.subr.mxu0 0.0
  %430 = vmatpush1.msra.mxu0 0.0
  %431 = vmatprep.subr.mxu0 0.0
  %432 = vmatpush1.msra.mxu0 0.0
  %433 = vmatprep.subr.mxu0 0.0
  %434 = vmatpush1.msra.mxu0 0.0
  %435 = vmatprep.subr.mxu0 0.0
  %436 = vmatpush1.msra.mxu0 0.0
  %437 = vmatprep.subr.mxu0 0.0
  %438 = vmatpush1.msra.mxu0 0.0
  %439 = vmatprep.subr.mxu0 0.0
  %440 = vmatpush1.msra.mxu0 0.0
  %441 = vmatprep.subr.mxu0 0.0
  %442 = vmatpush1.msra.mxu0 0.0
  %443 = vmatprep.subr.mxu0 0.0
  %444 = vmatpush1.msra.mxu0 0.0
  %445 = vmatprep.subr.mxu0 0.0
  %446 = vmatpush1.msra.mxu0 0.0
  %447 = vmatprep.subr.mxu0 0.0
  %448 = vmatpush1.msra.mxu0 0.0
  %449 = vmatprep.subr.mxu0 0.0
  %450 = vmatpush1.msra.mxu0 0.0
  %451 = vmatprep.subr.mxu0 0.0
  %452 = vmatpush1.msra.mxu0 0.0
  %453 = vmatprep.subr.mxu0 0.0
  %454 = vmatpush1.msra.mxu0 0.0
  %455 = vmatprep.subr.mxu0 0.0
  %456 = vmatpush1.msra.mxu0 0.0
  %457 = vmatprep.subr.mxu0 0.0
  %458 = vmatpush1.msra.mxu0 0.0
  %459 = vmatprep.subr.mxu0 0.0
  %460 = vmatpush1.msra.mxu0 0.0
  %461 = vmatprep.mubr.f32.mxu0 0.0
  %462 = vmatmul.mubr.f32.gmra.mrb[0].mxu0 %v379
  %v463 = vpop.f32.mrb[0].mxu0
  %v464 = vadd.f32 %v370, %v463
  %v465 = vpop.f32.mrb[0].mxu0
  %v466 = vadd.f32 %v370, %v465
  %467 = vmatprep.mubr.f32.mxu0 0.0
  %468 = vmatmul.mubr.f32.gmra.mrb[0].mxu0 %v382
  %v469 = vpop.f32.mrb[0].mxu0
  %v470 = vadd.f32 %v375, %v469
  %v471 = vpop.f32.mrb[0].mxu0
  %v472 = vadd.f32 %v375, %v471
  %473 = vdwg.mxu0
  %474 = vmatprep.subr.mxu0 %v348
  %475 = vmatpush1.msra.mxu0 %v347
  %476 = vmatprep.subr.mxu0 %v352
  %477 = vmatpush1.msra.mxu0 %v351
  %478 = vmatprep.subr.mxu0 %v356
  %479 = vmatpush1.msra.mxu0 %v355
  %480 = vmatprep.subr.mxu0 %v360
  %481 = vmatpush1.msra.mxu0 %v359
  %482 = vmatprep.subr.mxu0 %v395
  %483 = vmatpush1.msra.mxu0 %v392
  %484 = vmatprep.subr.mxu0 0.0
  %485 = vmatpush1.msra.mxu0 0.0
  %486 = vmatprep.subr.mxu0 0.0
  %487 = vmatpush1.msra.mxu0 0.0
  %488 = vmatprep.subr.mxu0 0.0
  %489 = vmatpush1.msra.mxu0 0.0
  %490 = vmatprep.subr.mxu0 0.0
  %491 = vmatpush1.msra.mxu0 0.0
  %492 = vmatprep.subr.mxu0 0.0
  %493 = vmatpush1.msra.mxu0 0.0
  %494 = vmatprep.subr.mxu0 0.0
  %495 = vmatpush1.msra.mxu0 0.0
  %496 = vmatprep.subr.mxu0 0.0
  %497 = vmatpush1.msra.mxu0 0.0
  %498 = vmatprep.subr.mxu0 0.0
  %499 = vmatpush1.msra.mxu0 0.0
  %500 = vmatprep.subr.mxu0 0.0
  %501 = vmatpush1.msra.mxu0 0.0
  %502 = vmatprep.subr.mxu0 0.0
  %503 = vmatpush1.msra.mxu0 0.0
  %504 = vmatprep.subr.mxu0 0.0
  %505 = vmatpush1.msra.mxu0 0.0
  %506 = vmatprep.subr.mxu0 0.0
  %507 = vmatpush1.msra.mxu0 0.0
  %508 = vmatprep.subr.mxu0 0.0
  %509 = vmatpush1.msra.mxu0 0.0
  %510 = vmatprep.subr.mxu0 0.0
  %511 = vmatpush1.msra.mxu0 0.0
  %512 = vmatprep.subr.mxu0 0.0
  %513 = vmatpush1.msra.mxu0 0.0
  %514 = vmatprep.subr.mxu0 0.0
  %515 = vmatpush1.msra.mxu0 0.0
  %516 = vmatprep.subr.mxu0 0.0
  %517 = vmatpush1.msra.mxu0 0.0
  %518 = vmatprep.subr.mxu0 0.0
  %519 = vmatpush1.msra.mxu0 0.0
  %520 = vmatprep.subr.mxu0 0.0
  %521 = vmatpush1.msra.mxu0 0.0
  %522 = vmatprep.subr.mxu0 0.0
  %523 = vmatpush1.msra.mxu0 0.0
  %524 = vmatprep.subr.mxu0 0.0
  %525 = vmatpush1.msra.mxu0 0.0
  %526 = vmatprep.subr.mxu0 0.0
  %527 = vmatpush1.msra.mxu0 0.0
  %528 = vmatprep.subr.mxu0 0.0
  %529 = vmatpush1.msra.mxu0 0.0
  %530 = vmatprep.subr.mxu0 0.0
  %531 = vmatpush1.msra.mxu0 0.0
  %532 = vmatprep.subr.mxu0 0.0
  %533 = vmatpush1.msra.mxu0 0.0
  %534 = vmatprep.subr.mxu0 0.0
  %535 = vmatpush1.msra.mxu0 0.0
  %536 = vmatprep.subr.mxu0 0.0
  %537 = vmatpush1.msra.mxu0 0.0
  %538 = vmatprep.mubr.f32.mxu0 0.0
  %539 = vmatmul.mubr.f32.gmra.mrb[0].mxu0 %v379
  %v540 = vpop.f32.mrb[0].mxu0
  %v541 = vadd.f32 %v370, %v540
  %v542 = vpop.f32.mrb[0].mxu0
  %v543 = vadd.f32 %v370, %v542
  %544 = vmatprep.mubr.f32.mxu0 0.0
  %545 = vmatmul.mubr.f32.gmra.mrb[0].mxu0 %v382
  %v546 = vpop.f32.mrb[0].mxu0
  %v547 = vadd.f32 %v375, %v546
  %v548 = vpop.f32.mrb[0].mxu0
  %v549 = vadd.f32 %v375, %v548
  %550 = vdwg.mxu0
  %551 = vst [vmem:[%s4] sm:$0xff] %v464
  %552 = vst [vmem:[%s4 + $0x8] sm:$0xff] %v466
  %553 = vst [vmem:[%s4 + $0x10] sm:$0xff] %v470
  %554 = vst [vmem:[%s4 + $0x18] sm:$0xff] %v472
  %s555 = scalar_lea.vmem %s4, 32
  %556 = vst [vmem:[%s555] sm:$0xff] %v541
  %557 = vst [vmem:[%s555 + $0x8] sm:$0xff] %v543
  %558 = vst [vmem:[%s555 + $0x10] sm:$0xff] %v547
  %559 = vst [vmem:[%s555 + $0x18] sm:$0xff] %v549
  // Predicated region
  $region18: #{pixel_shuffle_pack.1} parent=0 // pred_check
    _
  $region19: #{pixel_shuffle_pack.1} parent=0 // pred_check_branch
    %561 = sbr.rel (0) target = $region21
  $region20: #{pixel_shuffle_pack.1} parent=0 // pred_region
    _
  $region21: #{pixel_shuffle_pack.1} parent=0 // pred_fallthru
    _
  // Predicated region
  $region22: #{pixel_shuffle_pack.1} parent=0 // pred_check
    _
  $region23: #{pixel_shuffle_pack.1} parent=0 // pred_check_branch
    %563 = sbr.rel (0) target = $region25
  $region24: #{pixel_shuffle_pack.1} parent=0 // pred_region
    _
  $region25: #{pixel_shuffle_pack.1} parent=0 // pred_fallthru
    _

</llo_original>
